<compile_context>
chip_gen: v5e
topology: v5e:2x2
jax: 0.10.0
libtpu: 0.0.40
codegen_flags: <defaults>
</compile_context>

<pallas_src>
import jax
import jax.numpy as jnp
from jax.experimental import pallas as pl
from jax.experimental.pallas import tpu as pltpu

_LANE = 128
_SUBLANE = 8
_MIB = 1024 * 1024
# Only bother single-buffering invariant operands once they are big enough to
# matter (keeps the tiny-weight demo on the plain, well-trodden path).
_SINGLE_BUFFER_THRESHOLD_BYTES = 4 * _MIB


def _round_up(n, m):
    return ((n + m - 1) // m) * m


def _round_down(n, m):
    return (n // m) * m


def _vmem_tile_bytes(rows, cols, itemsize=4):
    # VMEM footprint of a tile after (8, 128) layout padding.
    return _round_up(max(rows, 1), _SUBLANE) * _round_up(max(cols, 1), _LANE) * itemsize


def _make_kernel(width1_head: bool):
    def kernel(x_ref, w1_ref, b1_ref, wef_ref, bef_ref, out_ref):
        # encoder layer 1: Linear -> ReLU   (MXU + VPU)
        h = jnp.dot(x_ref[...], w1_ref[...],
                    preferred_element_type=jnp.float32) + b1_ref[...]
        h = jnp.maximum(h, 0.0)

        if width1_head:
            # Fused (encoder L2 + fc) head with output_dim == 1:
            #   (1, H) . (TILE_B, H)^T -> (1, TILE_B)
            # Batch lands on the lane axis, so the store is lane-dense and the
            # writeback DMA is contiguous (no 1-lane masked partial stores).
            logits = jax.lax.dot_general(
                wef_ref[...], h,
                dimension_numbers=(((1,), (1,)), ((), ())),
                preferred_element_type=jnp.float32)
            logits = logits + bef_ref[...]          # (1, 1) broadcast over lanes
        else:
            # General output_dim: keep the fused head on the MXU.
            # TODO(synk): for 1 < output_dim < 128, pad the out block to 128
            # lanes and slice on the host to keep stores unmasked.
            logits = jnp.dot(h, wef_ref[...],
                             preferred_element_type=jnp.float32) + bef_ref[...]

        out_ref[...] = jax.nn.sigmoid(logits)

    return kernel


def prepare_params(params):
    """One-time host-side parameter prep (NOT redone per forward call).

    Folds encoder layer 2 and fc (both affine, no nonlinearity in between) and
    lays the width-1 head out as a broadcast row. Decoder weights are dropped
    because the module's forward discards the decoder output.
    """
    (w_e1, b_e1, w_e2, b_e2,
     _w_d1, _b_d1, _w_d2, _b_d2,      # decoder: output discarded by forward()
     w_fc, b_fc) = params

    w_ef = w_e2 @ w_fc                # (hidden_dim, output_dim)
    b_ef = b_e2 @ w_fc + b_fc         # (1, output_dim)
    output_dim = w_fc.shape[1]
    if output_dim == 1:
        w_head = w_ef.T               # (1, hidden_dim): row for the fused head
    else:
        w_head = w_ef                 # (hidden_dim, output_dim)
    return (w_e1, b_e1, w_head, b_ef)


def autoencoder_forward(x, prepared, *, max_tile_rows=None):
    w_e1, b_e1, w_head, b_ef = prepared
    B, input_dim = x.shape
    output_dim = b_ef.shape[1]
    width1_head = (output_dim == 1)
    itemsize = x.dtype.itemsize

    # ---- bytes-based batch tiling -------------------------------------------
    # Target ~2 MiB of x HBM traffic per grid step; also cap the lane-padded
    # VMEM footprint of one x buffer at ~8 MiB (it is double-buffered).
    padded_cols = _round_up(input_dim, _LANE)
    rows_hbm = (2 * _MIB) // max(itemsize * input_dim, 1)
    rows_vmem = (8 * _MIB) // max(itemsize * padded_cols, 1)
    tile_rows = max(_LANE, min(rows_hbm, rows_vmem))
    if max_tile_rows is not None:
        tile_rows = max(_LANE, min(tile_rows, max_tile_rows))

    if B <= tile_rows:
        TILE_B = B                                  # single full-batch block
    else:
        TILE_B = _round_down(tile_rows, _LANE)      # aligned multi-tile blocks
    grid_b = pl.cdiv(B, TILE_B)                     # ragged tail masked by Pallas

    # ---- specs ---------------------------------------------------------------
    def _invariant_spec(shape, nbytes):
        kwargs = {}
        if nbytes >= _SINGLE_BUFFER_THRESHOLD_BYTES:
            # Constant block index -> no need to double-buffer; halves resident
            # weight VMEM (matters for big hidden dims / v7x's 64 MiB VMEM).
            kwargs["pipeline_mode"] = pl.Buffered(1)
        return pl.BlockSpec(shape, lambda i: (0, 0), **kwargs)

    in_specs = [
        pl.BlockSpec((TILE_B, input_dim), lambda i: (i, 0)),                 # x tile
        _invariant_spec(w_e1.shape, w_e1.size * w_e1.dtype.itemsize),        # W_e1
        _invariant_spec(b_e1.shape, b_e1.size * b_e1.dtype.itemsize),        # b_e1
        _invariant_spec(w_head.shape, w_head.size * w_head.dtype.itemsize),  # fused W
        _invariant_spec(b_ef.shape, b_ef.size * b_ef.dtype.itemsize),        # fused b
    ]

    if width1_head:
        # Lane-dense output: batch along lanes, one (1, TILE_B) block per step.
        out_shape = jax.ShapeDtypeStruct((1, grid_b * TILE_B), jnp.float32)
        out_spec = pl.BlockSpec((1, TILE_B), lambda i: (0, i))
        out_rows, out_cols = 1, TILE_B
    else:
        out_shape = jax.ShapeDtypeStruct((B, output_dim), jnp.float32)
        out_spec = pl.BlockSpec((TILE_B, output_dim), lambda i: (i, 0))
        out_rows, out_cols = TILE_B, output_dim

    # ---- VMEM budget ---------------------------------------------------------
    def _weight_vmem(arr):
        nbytes = arr.size * arr.dtype.itemsize
        bufs = 1 if nbytes >= _SINGLE_BUFFER_THRESHOLD_BYTES else 2
        return bufs * _vmem_tile_bytes(arr.shape[0], arr.shape[1], arr.dtype.itemsize)

    vmem_needed = (
        2 * _vmem_tile_bytes(TILE_B, input_dim, itemsize)       # x, double-buffered
        + 2 * _vmem_tile_bytes(out_rows, out_cols, 4)           # out, double-buffered
        + sum(_weight_vmem(a) for a in (w_e1, b_e1, w_head, b_ef)))
    # 2x headroom for compiler scratch; floor at 16 MiB (min default anywhere),
    # cap at 64 MiB (v7x physical VMEM).
    vmem_limit = int(min(64 * _MIB, max(16 * _MIB, 2 * vmem_needed)))

    out = pl.pallas_call(
        _make_kernel(width1_head),
        grid=(grid_b,),
        in_specs=in_specs,
        out_specs=out_spec,
        out_shape=out_shape,
        compiler_params=pltpu.CompilerParams(
            # Batch axis is embarrassingly parallel (sharded across v7x's 2 TCs).
            # TODO(synk): if profiling shows one idle v7x TensorCore, switch this
            # axis to pltpu.CORE_PARALLEL.
            dimension_semantics=("parallel",),
            vmem_limit_bytes=vmem_limit,
        ),
    )(x, w_e1, b_e1, w_head, b_ef)

    if width1_head:
        out = out.reshape(-1)[:B]       # drop the masked tail of the last tile
    # torch.sigmoid(x).squeeze()
    return jnp.squeeze(out)


def init_params(key, input_dim, hidden_dim, latent_dim, output_dim):
    ks = jax.random.split(key, 10)
    scale = 0.1

    def lin(kw, kb, fan_in, fan_out):
        w = scale * jax.random.normal(kw, (fan_in, fan_out), jnp.float32)
        b = scale * jax.random.normal(kb, (1, fan_out), jnp.float32)
        return w, b

    w_e1, b_e1 = lin(ks[0], ks[1], input_dim, hidden_dim)
    w_e2, b_e2 = lin(ks[2], ks[3], hidden_dim, latent_dim)
    w_d1, b_d1 = lin(ks[4], ks[5], latent_dim, hidden_dim)
    w_d2, b_d2 = lin(ks[6], ks[7], hidden_dim, input_dim)
    w_fc, b_fc = lin(ks[8], ks[9], latent_dim, output_dim)
    return (w_e1, b_e1, w_e2, b_e2, w_d1, b_d1, w_d2, b_d2, w_fc, b_fc)


if __name__ == "__main__":
    B, INPUT_DIM, HIDDEN_DIM, LATENT_DIM, OUTPUT_DIM = 8, 32, 32, 16, 1

    key = jax.random.PRNGKey(0)
    k_x, k_p, k_x2 = jax.random.split(key, 3)
    params = init_params(k_p, INPUT_DIM, HIDDEN_DIM, LATENT_DIM, OUTPUT_DIM)
    prepared = prepare_params(params)          # one-time fold, not per call

    (w_e1, b_e1, w_e2, b_e2, _wd1, _bd1, _wd2, _bd2, w_fc, b_fc) = params

    def reference(xx):
        h = jnp.maximum(xx @ w_e1 + b_e1, 0.0)
        latent = h @ w_e2 + b_e2
        return jnp.squeeze(jax.nn.sigmoid(latent @ w_fc + b_fc))

    fwd = jax.jit(autoencoder_forward, static_argnames=("max_tile_rows",))

    # --- main small-shape check (single tile) ---------------------------------
    x = jax.random.normal(k_x, (B, INPUT_DIM), jnp.float32)
    y = fwd(x, prepared)
    jax.block_until_ready(y)
    assert y.shape == (B,), y.shape
    assert jnp.allclose(y, reference(x), atol=1e-5, rtol=1e-5)

    # --- multi-tile + ragged-tail check (grid > 1, lane-dense output) ---------
    B2 = 300
    x2 = jax.random.normal(k_x2, (B2, INPUT_DIM), jnp.float32)
    y2 = fwd(x2, prepared, max_tile_rows=128)   # forces TILE_B=128, grid=3, ragged tail
    jax.block_until_ready(y2)
    assert y2.shape == (B2,), y2.shape
    assert jnp.allclose(y2, reference(x2), atol=1e-5, rtol=1e-5)

    print("KERNEL_OK")
</pallas_src>

<mosaic_0001>
module attributes {stable_mosaic.version = 11 : i64} {
  func.func @kernel(%arg0: i32, %arg1: memref<8x32xf32, #tpu.memory_space<vmem>>, %arg2: memref<32x32xf32, #tpu.memory_space<vmem>>, %arg3: memref<1x32xf32, #tpu.memory_space<vmem>>, %arg4: memref<1x32xf32, #tpu.memory_space<vmem>>, %arg5: memref<1x1xf32, #tpu.memory_space<vmem>>, %arg6: memref<1x8xf32, #tpu.memory_space<vmem>>) attributes {dimension_semantics = [#tpu.dimension_semantics<parallel>], iteration_bounds = array<i64: 1>, scalar_prefetch = 0 : i64, scratch_operands = 0 : i64, tpu.core_type = #tpu.core_type<tc>, window_params = [{transform_indices = @transform_0, window_bounds = array<i64: 8, 32>}, {pipeline_mode = #tpu.pipeline_mode<synchronous>, transform_indices = @transform_1, window_bounds = array<i64: 32, 32>}, {pipeline_mode = #tpu.pipeline_mode<synchronous>, transform_indices = @transform_2, window_bounds = array<i64: 1, 32>}, {pipeline_mode = #tpu.pipeline_mode<synchronous>, transform_indices = @transform_3, window_bounds = array<i64: 1, 32>}, {pipeline_mode = #tpu.pipeline_mode<synchronous>, transform_indices = @transform_4, window_bounds = array<i64: 1, 1>}, {transform_indices = @transform_5, window_bounds = array<i64: 1, 8>}]} {
    %c0 = arith.constant 0 : index
    %c0_0 = arith.constant 0 : index
    %0 = vector.load %arg1[%c0, %c0_0] : memref<8x32xf32, #tpu.memory_space<vmem>>, vector<8x32xf32>
    %c0_1 = arith.constant 0 : index
    %c0_2 = arith.constant 0 : index
    %1 = vector.load %arg2[%c0_1, %c0_2] : memref<32x32xf32, #tpu.memory_space<vmem>>, vector<32x32xf32>
    %cst = arith.constant dense<0.000000e+00> : vector<8x32xf32>
    %2 = tpu.matmul %0, %1, %cst {dimension_numbers = #tpu.dot_dimension_numbers<[1], [0], [0], [1], [0, 0, 1, 1], [], []>} : vector<8x32xf32>, vector<32x32xf32>, vector<8x32xf32> -> vector<8x32xf32>
    %c0_3 = arith.constant 0 : index
    %c0_4 = arith.constant 0 : index
    %3 = vector.load %arg3[%c0_3, %c0_4] : memref<1x32xf32, #tpu.memory_space<vmem>>, vector<1x32xf32>
    %4 = vector.broadcast %3 : vector<1x32xf32> to vector<8x32xf32>
    %5 = arith.addf %2, %4 : vector<8x32xf32>
    %cst_5 = arith.constant 0.000000e+00 : f32
    %6 = vector.broadcast %cst_5 : f32 to vector<8x32xf32>
    %7 = arith.maximumf %5, %6 : vector<8x32xf32>
    %c0_6 = arith.constant 0 : index
    %c0_7 = arith.constant 0 : index
    %8 = vector.load %arg4[%c0_6, %c0_7] : memref<1x32xf32, #tpu.memory_space<vmem>>, vector<1x32xf32>
    %cst_8 = arith.constant dense<0.000000e+00> : vector<1x8xf32>
    %9 = tpu.matmul %8, %7, %cst_8 {dimension_numbers = #tpu.dot_dimension_numbers<[1], [1], [0], [0], [0, 0, 1, 0], [], []>} : vector<1x32xf32>, vector<8x32xf32>, vector<1x8xf32> -> vector<1x8xf32>
    %c0_9 = arith.constant 0 : index
    %c0_10 = arith.constant 0 : index
    %10 = vector.load %arg5[%c0_9, %c0_10] : memref<1x1xf32, #tpu.memory_space<vmem>>, vector<1x1xf32>
    %11 = vector.broadcast %10 : vector<1x1xf32> to vector<1x8xf32>
    %12 = arith.addf %9, %11 : vector<1x8xf32>
    %13 = arith.negf %12 : vector<1x8xf32>
    %14 = math.exp %13 : vector<1x8xf32>
    %cst_11 = arith.constant 1.000000e+00 : f32
    %15 = vector.broadcast %cst_11 : f32 to vector<1x8xf32>
    %16 = arith.addf %15, %14 : vector<1x8xf32>
    %17 = arith.divf %15, %16 : vector<1x8xf32>
    %c0_12 = arith.constant 0 : index
    %c0_13 = arith.constant 0 : index
    %18 = vector.load %arg6[%c0_12, %c0_13] : memref<1x8xf32, #tpu.memory_space<vmem>>, vector<1x8xf32>
    tpu.vector_store %arg6[%c0_12, %c0_13], %17 {strides = array<i32>} : memref<1x8xf32, #tpu.memory_space<vmem>>, vector<1x8xf32>,
    return
  }
  func.func @transform_0(%arg0: i32) -> (i32, i32) {
    %c0_i32 = arith.constant 0 : i32
    %c0_i32_0 = arith.constant 0 : i32
    return %arg0, %c0_i32 : i32, i32
  }
  func.func @transform_1(%arg0: i32) -> (i32, i32) {
    %c0_i32 = arith.constant 0 : i32
    %c0_i32_0 = arith.constant 0 : i32
    %c0_i32_1 = arith.constant 0 : i32
    return %c0_i32, %c0_i32_0 : i32, i32
  }
  func.func @transform_2(%arg0: i32) -> (i32, i32) {
    %c0_i32 = arith.constant 0 : i32
    %c0_i32_0 = arith.constant 0 : i32
    %c0_i32_1 = arith.constant 0 : i32
    return %c0_i32, %c0_i32_0 : i32, i32
  }
  func.func @transform_3(%arg0: i32) -> (i32, i32) {
    %c0_i32 = arith.constant 0 : i32
    %c0_i32_0 = arith.constant 0 : i32
    %c0_i32_1 = arith.constant 0 : i32
    return %c0_i32, %c0_i32_0 : i32, i32
  }
  func.func @transform_4(%arg0: i32) -> (i32, i32) {
    %c0_i32 = arith.constant 0 : i32
    %c0_i32_0 = arith.constant 0 : i32
    %c0_i32_1 = arith.constant 0 : i32
    return %c0_i32, %c0_i32_0 : i32, i32
  }
  func.func @transform_5(%arg0: i32) -> (i32, i32) {
    %c0_i32 = arith.constant 0 : i32
    %c0_i32_0 = arith.constant 0 : i32
    return %c0_i32, %arg0 : i32, i32
  }
}

</mosaic_0001>

<llo_original>
// kernel: autoencoder_forward.1
$region0: #{autoencoder_forward.1}
  #allocation0 [shape = 'u32[]', space=smem, size = 0x4, offset = 0x4, fixed_abs, tag = 'smem constant byte address 0x4 - core index']
  #allocation1 [shape = 'u32[72,128]{1,0:T(1,128)}', space=vmem, size = 0x9000, scoped, tag = 'internal scratch']
  #allocation2 [shape = 'f32[1,1]{1,0:T(1,128)S(1)}', space=vmem, size = 0x200, scoped, tag = 'scoped memory for autoencoder_forward.1']
  %s0 = inlined_call_operand.hbm [shape: f32[8,32], index: 0, kind: input, shape index: {}]
  %s1 = inlined_call_operand.hbm [shape: f32[32,32], index: 1, kind: input, shape index: {}]
  %s2 = inlined_call_operand.vmem [shape: f32[1,32], index: 2, kind: input, shape index: {}]
  %s3 = inlined_call_operand.vmem [shape: f32[1,32], index: 3, kind: input, shape index: {}]
  %s4 = inlined_call_operand.<no memory space> [shape: f32[1,1], index: 4, kind: input, shape index: {}]
  %s5 = inlined_call_operand.hbm [shape: f32[1,8], index: 5, kind: output, shape index: {}]
  %s6 = sld [smem:[#allocation0]]
  $region38: #{autoencoder_forward.1} parent=0
    _
  %s8 = ssub.s32 1, %s6
  %s9 = scalar_select 0, %s8, %s6
  %v10 = vstv %s4
  %11 = vst [vmem:[#allocation2] sm:$0x1] %v10
  $region1: #{autoencoder_forward.1} parent=0
    #allocation3 [shape = 'u8[4096]{0}', space=vmem, size = 0x1000, scoped, tag = 'input window, operand 0, single buffered']
    #allocation4 [shape = 's32[1]{0}', space=sflag, size = 0x4, scoped, tag = 'scoped memory for autoencoder_forward.1']
    #allocation5 [shape = 's32[1]{0}', space=sflag, size = 0x4, scoped, tag = 'scoped memory for autoencoder_forward.1']
    #allocation6 [shape = 'u8[16384]{0}', space=vmem, size = 0x4000, scoped, tag = 'input window, operand 1, single buffered']
    #allocation7 [shape = 's32[1]{0}', space=sflag, size = 0x4, scoped, tag = 'scoped memory for autoencoder_forward.1']
    #allocation8 [shape = 'u8[512]{0}', space=vmem, size = 0x400, scoped, tag = 'output window, operand 0, single buffered']
    %12 = vsyncpa [#allocation4], 0
    %13 = vsyncpa [#allocation7], 0
    %14 = vsyncpa [#allocation5], 0
    // Predicated region
    $region2: #{autoencoder_forward.1} parent=1 // pred_check
      _
    $region3: #{autoencoder_forward.1} parent=1 // pred_check_branch
      %16 = sbr.rel (0) target = $region5
    $region4: #{autoencoder_forward.1} parent=1 // pred_region
      %18 = vsyncadd [#allocation4], 0
      %s20 = sshll.u32 %s0, 4
      %s21 = int_to_ptr.hbm [resolvable:$true] %s20
      %s22 = sshll.u32 [#allocation3], 4
      %s23 = int_to_ptr.vmem [resolvable:$true] %s22
      %25 = dma.hbm_to_vmem [thread:$0]  %s21, 128, %s23, [#allocation4]
    $region5: #{autoencoder_forward.1} parent=1 // pred_fallthru
      _
    // Predicated region
    $region6: #{autoencoder_forward.1} parent=1 // pred_check
      _
    $region7: #{autoencoder_forward.1} parent=1 // pred_check_branch
      %27 = sbr.rel (0) target = $region9
    $region8: #{autoencoder_forward.1} parent=1 // pred_region
      %29 = vsyncadd [#allocation7], 0
      %s30 = sshll.u32 %s1, 4
      %s31 = int_to_ptr.hbm [resolvable:$true] %s30
      %s32 = sshll.u32 [#allocation6], 4
      %s33 = int_to_ptr.vmem [resolvable:$true] %s32
      %38 = dma.hbm_to_vmem [thread:$0]  %s31, 512, %s33, [#allocation7], 128, 128, 8
    $region9: #{autoencoder_forward.1} parent=1 // pred_fallthru
      _
    // Predicated region
    $region10: #{autoencoder_forward.1} parent=1 // pred_check
      _
    $region11: #{autoencoder_forward.1} parent=1 // pred_check_branch
      %40 = sbr.rel (0) target = $region13
    $region12: #{autoencoder_forward.1} parent=1 // pred_region
      _
    $region13: #{autoencoder_forward.1} parent=1 // pred_fallthru
      _
    // Predicated region
    $region14: #{autoencoder_forward.1} parent=1 // pred_check
      _
    $region15: #{autoencoder_forward.1} parent=1 // pred_check_branch
      %42 = sbr.rel (0) target = $region17
    $region16: #{autoencoder_forward.1} parent=1 // pred_region
      _
    $region17: #{autoencoder_forward.1} parent=1 // pred_fallthru
      _
    // Predicated region
    $region18: #{autoencoder_forward.1} parent=1 // pred_check
      _
    $region19: #{autoencoder_forward.1} parent=1 // pred_check_branch
      %44 = sbr.rel (0) target = $region21
    $region20: #{autoencoder_forward.1} parent=1 // pred_region
      _
    $region21: #{autoencoder_forward.1} parent=1 // pred_fallthru
      _
    // Predicated region
    $region22: #{autoencoder_forward.1} parent=1 // pred_check
      _
    $region23: #{autoencoder_forward.1} parent=1 // pred_check_branch
      %46 = sbr.rel (0) target = $region25
    $region24: #{autoencoder_forward.1} parent=1 // pred_region
      %48 = dma.done [#allocation4], 128
    $region25: #{autoencoder_forward.1} parent=1 // pred_fallthru
      _
    // Predicated region
    $region26: #{autoencoder_forward.1} parent=1 // pred_check
      _
    $region27: #{autoencoder_forward.1} parent=1 // pred_check_branch
      %50 = sbr.rel (0) target = $region29
    $region28: #{autoencoder_forward.1} parent=1 // pred_region
      %52 = dma.done [#allocation7], 512
    $region29: #{autoencoder_forward.1} parent=1 // pred_fallthru
      _
    %v53 = vld [vmem:[#allocation3] sm:$0xff]
    %v54 = vld [vmem:[#allocation6] sm:$0xff]
    %v55 = vld [vmem:[#allocation6 + $0x8] sm:$0xff]
    %v56 = vld [vmem:[#allocation6 + $0x10] sm:$0xff]
    %v57 = vld [vmem:[#allocation6 + $0x18] sm:$0xff]
    %v58 = vld [vmem:[%s2] sm:$0x1]
    %v60 = vperm.slane %v58, 0
    %vm62 = vcmask 261120
    %v64 = vsel %vm62, %v53, 0
    %66 = vmatpush.msra.mxu0 0.0
    %67 = vmatpush.msra.mxu0 0.0
    %68 = vmatpush.msra.mxu0 0.0
    %69 = vmatpush.msra.mxu0 0.0
    %70 = vmatpush.msra.mxu0 0.0
    %71 = vmatpush.msra.mxu0 0.0
    %72 = vmatpush.msra.mxu0 0.0
    %73 = vmatpush.msra.mxu0 0.0
    %74 = vmatpush.msra.mxu0 0.0
    %75 = vmatpush.msra.mxu0 0.0
    %76 = vmatpush.msra.mxu0 0.0
    %77 = vmatpush.msra.mxu0 0.0
    %78 = vmatpush.msra.mxu0 %v57
    %79 = vmatpush.msra.mxu0 %v56
    %80 = vmatpush.msra.mxu0 %v55
    %81 = vmatpush.msra.mxu0 %v54
    %82 = vmatmul.f32.gmra.mxu0 %v64
    %v83 = vpop.f32.mrf.mxu0
    %v84 = vadd.f32 %v60, %v83
    %85 = vdwg.mxu0
    %v86 = vmax.f32 %v84, 0.0
    %v87 = vld [vmem:[%s3] sm:$0x1]
    %v88 = vld [vmem:[#allocation2] sm:$0x1]
    %90 = vset.pattern.permute.xlu0 0
    %91 = vperm.xlu0 %90, %v88
    %v92 = vpop.permute.xlu0 %91
    %v94 = vperm.slane %v92, 0
    %v96 = vsel %vm62, %v87, 0
    %v99 = vsel %vm62, %v86, 0
    %101 = vmatpush.xpose.msra.mxu0 0.0
    %102 = vmatpush.xpose.msra.mxu0 0.0
    %103 = vmatpush.xpose.msra.mxu0 0.0
    %104 = vmatpush.xpose.msra.mxu0 0.0
    %105 = vmatpush.xpose.msra.mxu0 0.0
    %106 = vmatpush.xpose.msra.mxu0 0.0
    %107 = vmatpush.xpose.msra.mxu0 0.0
    %108 = vmatpush.xpose.msra.mxu0 0.0
    %109 = vmatpush.xpose.msra.mxu0 0.0
    %110 = vmatpush.xpose.msra.mxu0 0.0
    %111 = vmatpush.xpose.msra.mxu0 0.0
    %112 = vmatpush.xpose.msra.mxu0 0.0
    %113 = vmatpush.xpose.msra.mxu0 0.0
    %114 = vmatpush.xpose.msra.mxu0 0.0
    %115 = vmatpush.xpose.msra.mxu0 0.0
    %116 = vmatpush.xpose.msra.mxu0 %v99
    %117 = vmatmul.f32.gmra.mxu0 %v96
    %v118 = vpop.f32.mrf.mxu0
    %v119 = vadd.f32 %v94, %v118
    %120 = vdwg.mxu0
    %v121 = vxor.u32 %v119, 2147483648
    %v122 = vmul.f32 %v121, 1.442695
    %v123 = vpow.pop %v122
    %v124 = vadd.f32 %v123, 1.0
    %v125 = vrcp.pop %v124
    %v126 = vmul.f32 %v124, %v125
    %v127 = vsub.f32 1.0, %v126
    %v128 = vmul.f32 %v125, %v127
    %v129 = vadd.f32 %v125, %v128
    %vm130 = vweird.f32 %v124
    %vm131 = vweird.f32 %v125
    %vm132 = vmor %vm130, %vm131
    %v133 = vsel %vm132, %v125, %v129
    %v134 = vand.u32 2147483647, %v124
    %vm135 = vcmp.eq.f32.partialorder %v134, 8.507059e+37
    %v136 = vand.u32 %v124, 2147483648
    %v137 = vor.u32 1.1754944e-38, %v136
    %v138 = vsel %vm135, %v137, %v133
    %v139 = vmul.f32 1.0, %v138
    %vm140 = vcmask 57344
    %141 = vst.msk [vmem:[#allocation8] sm:$0x1] %vm140, %v139
    // Predicated region
    $region30: #{autoencoder_forward.1} parent=1 // pred_check
      _
    $region31: #{autoencoder_forward.1} parent=1 // pred_check_branch
      %143 = sbr.rel (0) target = $region33
    $region32: #{autoencoder_forward.1} parent=1 // pred_region
      %145 = vsyncadd [#allocation5], 0
      %s147 = sshll.u32 [#allocation8], 4
      %s148 = int_to_ptr.vmem [resolvable:$true] %s147
      %s149 = sshll.u32 %s5, 4
      %s150 = int_to_ptr.hbm [resolvable:$true] %s149
      %152 = dma.vmem_to_hbm [thread:$0]  %s148, 16, %s150, [#allocation5]
    $region33: #{autoencoder_forward.1} parent=1 // pred_fallthru
      _
    // Predicated region
    $region34: #{autoencoder_forward.1} parent=1 // pred_check
      _
    $region35: #{autoencoder_forward.1} parent=1 // pred_check_branch
      %154 = sbr.rel (0) target = $region37
    $region36: #{autoencoder_forward.1} parent=1 // pred_region
      %156 = dma.done [#allocation5], 16
    $region37: #{autoencoder_forward.1} parent=1 // pred_fallthru
      _
    %157 = vsyncpa [#allocation4], 1
    %158 = vsyncpa [#allocation7], 1
    %159 = vsyncpa [#allocation5], 1

</llo_original>
